<compile_context>
chip_gen: v6e
topology: v6e:2x2x1
jax: 0.10.0
libtpu: 0.0.40
codegen_flags: <defaults>
</compile_context>

<pallas_src>
import functools

import jax
import jax.numpy as jnp
import numpy as np
from jax import lax
from jax.experimental import pallas as pl
from jax.experimental.pallas import tpu as pltpu


# -----------------------------------------------------------------------------
# Packed kernel: one whole image per lane-row (row-major flat), nb images/block
# -----------------------------------------------------------------------------
def _sobel_packed_kernel(x_ref, o_ref, *, H, W):
    """x_ref: (nb, H*W) f32 -- each row is one whole image, row-major flat.
    o_ref: (nb, 2*H*W) f32 -- per image: Gx (H*W) followed by Gy (H*W)."""
    HW = H * W
    x = x_ref[...]

    # Boundary masks from a single (1, H*W) lane iota (broadcast over images).
    lane = lax.broadcasted_iota(jnp.int32, (1, HW), 1)
    col = lane % W
    has_l = col != 0               # a left  neighbour exists (image col > 0)
    has_r = col != (W - 1)         # a right neighbour exists
    has_u = lane >= W              # an upper neighbour exists (image row > 0)
    has_d = lane < (H - 1) * W     # a lower neighbour exists

    # Shifted views: in the flat row-major layout the 4-neighbourhood is a
    # pure lane roll (+-1 for columns, +-W for rows).  Roll wrap-around only
    # ever lands on positions the boundary masks zero out.
    left = jnp.where(has_l, pltpu.roll(x, 1, axis=1), 0.0)
    right = jnp.where(has_r, pltpu.roll(x, (HW - 1) % HW, axis=1), 0.0)

    # Separable Sobel: column taps shared by both output channels.
    d = left - right               # cols [1, 0, -1]
    s = left + x + x + right       # cols [1, 2, 1]

    up_d = jnp.where(has_u, pltpu.roll(d, W % HW, axis=1), 0.0)
    dn_d = jnp.where(has_d, pltpu.roll(d, (HW - W) % HW, axis=1), 0.0)
    up_s = jnp.where(has_u, pltpu.roll(s, W % HW, axis=1), 0.0)
    dn_s = jnp.where(has_d, pltpu.roll(s, (HW - W) % HW, axis=1), 0.0)

    gx = up_d + d + d + dn_d       # rows [1, 2, 1]  -> Gx
    gy = up_s - dn_s               # rows [1, 0, -1] -> Gy

    # Two lane-dense slab stores (lane-aligned whenever H*W % 128 == 0).
    o_ref[:, 0:HW] = gx.astype(o_ref.dtype)
    o_ref[:, HW:2 * HW] = gy.astype(o_ref.dtype)


# -----------------------------------------------------------------------------
# Fallback kernel: one (large) image per grid step, rows on sublanes.
# -----------------------------------------------------------------------------
def _sobel_image_kernel(x_ref, o_ref):
    """x_ref: (1, H, W) f32; o_ref: (1, 2, H, W) f32."""
    x = x_ref[0]
    H, W = x.shape
    col = lax.broadcasted_iota(jnp.int32, (1, W), 1)
    row = lax.broadcasted_iota(jnp.int32, (H, 1), 0)

    left = jnp.where(col != 0, pltpu.roll(x, 1, axis=1), 0.0)
    right = jnp.where(col != W - 1, pltpu.roll(x, (W - 1) % W, axis=1), 0.0)
    d = left - right
    s = left + x + x + right
    d_up = jnp.where(row != 0, pltpu.roll(d, 1, axis=0), 0.0)
    d_dn = jnp.where(row != H - 1, pltpu.roll(d, (H - 1) % H, axis=0), 0.0)
    s_up = jnp.where(row != 0, pltpu.roll(s, 1, axis=0), 0.0)
    s_dn = jnp.where(row != H - 1, pltpu.roll(s, (H - 1) % H, axis=0), 0.0)

    o_ref[0, 0] = (d_up + d + d + d_dn).astype(o_ref.dtype)
    o_ref[0, 1] = (s_up - s_dn).astype(o_ref.dtype)


# -----------------------------------------------------------------------------
# Planning helpers
# -----------------------------------------------------------------------------
def _vmem_limit_bytes():
    """Generation-aware scoped-VMEM request (half the physical capacity)."""
    cap = 128 << 20
    try:
        cap = int(getattr(pltpu.get_tpu_info(), "vmem_capacity_bytes", cap))
    except Exception:
        pass
    return int(min(max(cap // 2, 16 << 20), 96 << 20))


def _pick_images_per_block(N, H, W, vmem_limit_bytes):
    """Images per grid step for the packed kernel.

    nb must divide N and keep the (nb, H*W)/(nb, 2*H*W) blocks legal under the
    (8, 128) sublane rule (nb % 8 == 0 or nb == N).  Returns None if no legal
    choice fits the VMEM budget (caller uses the per-image fallback)."""
    img_bytes = H * W * 4
    # ~16 live f32 slabs of (nb, H*W): in/out double-buffered + kernel temps.
    max_nb = vmem_limit_bytes // (16 * img_bytes)
    tgt_nb = max(1, (2 << 20) // img_bytes)          # ~2 MiB of input per step
    legal = [d for d in range(8, N + 1, 8) if N % d == 0] + [N]
    # Prefer >= 2 grid steps (v7x shards the batch grid across 2 TensorCores),
    # then the largest block within the target / VMEM budget.
    for lim in (min(max_nb, tgt_nb, N // 2), min(max_nb, tgt_nb), max_nb):
        fits = [d for d in legal if d <= lim]
        if fits:
            return max(fits)
    return None


# -----------------------------------------------------------------------------
# Public wrapper
# -----------------------------------------------------------------------------
def ime_sobel(x):
    """x: (N, 1, H, W) -> (N, 2, H, W) float32 (channel 0 = Gx, 1 = Gy)."""
    N, C, H, W = x.shape
    assert C == 1, "ImeSobel expects a single input channel"
    x = x.astype(jnp.float32)
    HW = H * W

    vmem_limit = _vmem_limit_bytes()
    compiler_params = pltpu.CompilerParams(
        dimension_semantics=("parallel",),
        vmem_limit_bytes=vmem_limit,
    )

    nb = _pick_images_per_block(N, H, W, vmem_limit)
    if nb is not None:
        # Packed path: (N, H*W) with grid over batch blocks of nb whole images.
        x_flat = x.reshape(N, HW)                         # contiguous -> free
        out = pl.pallas_call(
            functools.partial(_sobel_packed_kernel, H=H, W=W),
            out_shape=jax.ShapeDtypeStruct((N, 2 * HW), jnp.float32),
            grid=(N // nb,),
            in_specs=[pl.BlockSpec((nb, HW), lambda b: (b, 0))],
            out_specs=pl.BlockSpec((nb, 2 * HW), lambda b: (b, 0)),
            compiler_params=compiler_params,
        )(x_flat)
        # (N, 2*H*W) is exactly the row-major layout of (N, 2, H, W).
        return out.reshape(N, 2, H, W)

    # Fallback for very large images: one image per grid step.
    x_img = x.reshape(N, H, W)
    return pl.pallas_call(
        _sobel_image_kernel,
        out_shape=jax.ShapeDtypeStruct((N, 2, H, W), jnp.float32),
        grid=(N,),
        in_specs=[pl.BlockSpec((1, H, W), lambda b: (b, 0, 0))],
        out_specs=pl.BlockSpec((1, 2, H, W), lambda b: (b, 0, 0, 0)),
        compiler_params=compiler_params,
    )(x_img)


# -----------------------------------------------------------------------------
# Pure-JAX reference (matches the PyTorch Conv2d cross-correlation)
# -----------------------------------------------------------------------------
def _sobel_weights():
    edge_kx = np.array([[1, 0, -1], [2, 0, -2], [1, 0, -1]], dtype=np.float32)
    edge_ky = np.array([[1, 2, 1], [0, 0, 0], [-1, -2, -1]], dtype=np.float32)
    return jnp.asarray(np.stack((edge_kx, edge_ky)).reshape(2, 1, 3, 3))


def _reference(x, weights):
    return lax.conv_general_dilated(
        x.astype(jnp.float32), weights, window_strides=(1, 1),
        padding=((1, 1), (1, 1)),
        dimension_numbers=("NCHW", "OIHW", "NCHW"))


if __name__ == "__main__":
    key = jax.random.PRNGKey(0)
    N, H, W = 2, 16, 16
    x = jax.random.normal(key, (N, 1, H, W), dtype=jnp.float32)

    out = jax.block_until_ready(ime_sobel(x))

    ref = _reference(x, _sobel_weights()).reshape(-1, 2, H, W)
    np.testing.assert_allclose(np.asarray(out), np.asarray(ref),
                               rtol=1e-5, atol=1e-5)
    print("KERNEL_OK")
</pallas_src>

<mosaic_0001>
module attributes {stable_mosaic.version = 11 : i64} {
  func.func @_sobel_packed_kernel(%arg0: i32, %arg1: memref<2x256xf32, #tpu.memory_space<vmem>>, %arg2: memref<2x512xf32, #tpu.memory_space<vmem>>) attributes {dimension_semantics = [#tpu.dimension_semantics<parallel>], iteration_bounds = array<i64: 1>, scalar_prefetch = 0 : i64, scratch_operands = 0 : i64, tpu.core_type = #tpu.core_type<tc>, window_params = [{transform_indices = @transform_0, window_bounds = array<i64: 2, 256>}, {transform_indices = @transform_1, window_bounds = array<i64: 2, 512>}]} {
    %c0 = arith.constant 0 : index
    %c0_0 = arith.constant 0 : index
    %0 = vector.load %arg1[%c0, %c0_0] : memref<2x256xf32, #tpu.memory_space<vmem>>, vector<2x256xf32>
    %1 = tpu.iota {dimensions = array<i32: 1>} : vector<1x256xi32>
    %c16_i32 = arith.constant 16 : i32
    %c0_i32 = arith.constant 0 : i32
    %2 = arith.cmpi eq, %c16_i32, %c0_i32 : i32
    %c1_i32 = arith.constant 1 : i32
    %3 = arith.select %2, %c1_i32, %c16_i32 : i32
    %4 = vector.broadcast %3 : i32 to vector<1x256xi32>
    %5 = arith.remsi %1, %4 : vector<1x256xi32>
    %c0_i32_1 = arith.constant 0 : i32
    %6 = vector.broadcast %c0_i32_1 : i32 to vector<1x256xi32>
    %7 = arith.cmpi ne, %5, %6 : vector<1x256xi32>
    %c0_i32_2 = arith.constant 0 : i32
    %8 = vector.broadcast %c0_i32_2 : i32 to vector<1x256xi32>
    %9 = arith.cmpi slt, %5, %8 : vector<1x256xi32>
    %c0_i32_3 = arith.constant 0 : i32
    %10 = arith.cmpi slt, %3, %c0_i32_3 : i32
    %11 = vector.broadcast %10 : i1 to vector<1x256xi1>
    %12 = vector.broadcast %11 : vector<1x256xi1> to vector<1x256xi1>
    %13 = arith.xori %9, %12 : vector<1x256xi1>
    %14 = arith.andi %13, %7 : vector<1x256xi1>
    %15 = vector.broadcast %3 : i32 to vector<1x256xi32>
    %16 = arith.addi %5, %15 : vector<1x256xi32>
    %17 = arith.select %14, %16, %5 : vector<1x256xi1>, vector<1x256xi32>
    %c0_i32_4 = arith.constant 0 : i32
    %18 = vector.broadcast %c0_i32_4 : i32 to vector<1x256xi32>
    %19 = arith.cmpi ne, %17, %18 : vector<1x256xi32>
    %c15_i32 = arith.constant 15 : i32
    %20 = vector.broadcast %c15_i32 : i32 to vector<1x256xi32>
    %21 = arith.cmpi ne, %17, %20 : vector<1x256xi32>
    %c16_i32_5 = arith.constant 16 : i32
    %22 = vector.broadcast %c16_i32_5 : i32 to vector<1x256xi32>
    %23 = arith.cmpi sge, %1, %22 : vector<1x256xi32>
    %c240_i32 = arith.constant 240 : i32
    %24 = vector.broadcast %c240_i32 : i32 to vector<1x256xi32>
    %25 = arith.cmpi slt, %1, %24 : vector<1x256xi32>
    %c1_i32_6 = arith.constant 1 : i32
    %26 = tpu.dynamic_rotate %0 by %c1_i32_6 dim 1 : vector<2x256xf32>, i32 -> vector<2x256xf32>
    %cst = arith.constant 0.000000e+00 : f32
    %27 = vector.shape_cast %19 : vector<1x256xi1> to vector<1x256xi1>
    %28 = vector.broadcast %27 : vector<1x256xi1> to vector<2x256xi1>
    %29 = vector.broadcast %cst : f32 to vector<2x256xf32>
    %30 = arith.select %28, %26, %29 : vector<2x256xi1>, vector<2x256xf32>
    %c255_i32 = arith.constant 255 : i32
    %31 = tpu.dynamic_rotate %0 by %c255_i32 dim 1 : vector<2x256xf32>, i32 -> vector<2x256xf32>
    %cst_7 = arith.constant 0.000000e+00 : f32
    %32 = vector.shape_cast %21 : vector<1x256xi1> to vector<1x256xi1>
    %33 = vector.broadcast %32 : vector<1x256xi1> to vector<2x256xi1>
    %34 = vector.broadcast %cst_7 : f32 to vector<2x256xf32>
    %35 = arith.select %33, %31, %34 : vector<2x256xi1>, vector<2x256xf32>
    %36 = arith.subf %30, %35 : vector<2x256xf32>
    %37 = arith.addf %30, %0 : vector<2x256xf32>
    %38 = arith.addf %37, %0 : vector<2x256xf32>
    %39 = arith.addf %38, %35 : vector<2x256xf32>
    %c16_i32_8 = arith.constant 16 : i32
    %40 = tpu.dynamic_rotate %36 by %c16_i32_8 dim 1 : vector<2x256xf32>, i32 -> vector<2x256xf32>
    %cst_9 = arith.constant 0.000000e+00 : f32
    %41 = vector.shape_cast %23 : vector<1x256xi1> to vector<1x256xi1>
    %42 = vector.broadcast %41 : vector<1x256xi1> to vector<2x256xi1>
    %43 = vector.broadcast %cst_9 : f32 to vector<2x256xf32>
    %44 = arith.select %42, %40, %43 : vector<2x256xi1>, vector<2x256xf32>
    %c240_i32_10 = arith.constant 240 : i32
    %45 = tpu.dynamic_rotate %36 by %c240_i32_10 dim 1 : vector<2x256xf32>, i32 -> vector<2x256xf32>
    %cst_11 = arith.constant 0.000000e+00 : f32
    %46 = vector.shape_cast %25 : vector<1x256xi1> to vector<1x256xi1>
    %47 = vector.broadcast %46 : vector<1x256xi1> to vector<2x256xi1>
    %48 = vector.broadcast %cst_11 : f32 to vector<2x256xf32>
    %49 = arith.select %47, %45, %48 : vector<2x256xi1>, vector<2x256xf32>
    %c16_i32_12 = arith.constant 16 : i32
    %50 = tpu.dynamic_rotate %39 by %c16_i32_12 dim 1 : vector<2x256xf32>, i32 -> vector<2x256xf32>
    %cst_13 = arith.constant 0.000000e+00 : f32
    %51 = vector.shape_cast %23 : vector<1x256xi1> to vector<1x256xi1>
    %52 = vector.broadcast %51 : vector<1x256xi1> to vector<2x256xi1>
    %53 = vector.broadcast %cst_13 : f32 to vector<2x256xf32>
    %54 = arith.select %52, %50, %53 : vector<2x256xi1>, vector<2x256xf32>
    %c240_i32_14 = arith.constant 240 : i32
    %55 = tpu.dynamic_rotate %39 by %c240_i32_14 dim 1 : vector<2x256xf32>, i32 -> vector<2x256xf32>
    %cst_15 = arith.constant 0.000000e+00 : f32
    %56 = vector.shape_cast %25 : vector<1x256xi1> to vector<1x256xi1>
    %57 = vector.broadcast %56 : vector<1x256xi1> to vector<2x256xi1>
    %58 = vector.broadcast %cst_15 : f32 to vector<2x256xf32>
    %59 = arith.select %57, %55, %58 : vector<2x256xi1>, vector<2x256xf32>
    %60 = arith.addf %44, %36 : vector<2x256xf32>
    %61 = arith.addf %60, %36 : vector<2x256xf32>
    %62 = arith.addf %61, %49 : vector<2x256xf32>
    %63 = arith.subf %54, %59 : vector<2x256xf32>
    %c0_16 = arith.constant 0 : index
    %c0_17 = arith.constant 0 : index
    %64 = vector.load %arg2[%c0_16, %c0_17] : memref<2x512xf32, #tpu.memory_space<vmem>>, vector<2x256xf32>
    tpu.vector_store %arg2[%c0_16, %c0_17], %62 {strides = array<i32>} : memref<2x512xf32, #tpu.memory_space<vmem>>, vector<2x256xf32>,
    %c0_18 = arith.constant 0 : index
    %c256 = arith.constant 256 : index
    %65 = vector.load %arg2[%c0_18, %c256] : memref<2x512xf32, #tpu.memory_space<vmem>>, vector<2x256xf32>
    tpu.vector_store %arg2[%c0_18, %c256], %63 {strides = array<i32>} : memref<2x512xf32, #tpu.memory_space<vmem>>, vector<2x256xf32>,
    return
  }
  func.func @transform_0(%arg0: i32) -> (i32, i32) {
    %c0_i32 = arith.constant 0 : i32
    %c0_i32_0 = arith.constant 0 : i32
    return %arg0, %c0_i32 : i32, i32
  }
  func.func @transform_1(%arg0: i32) -> (i32, i32) {
    %c0_i32 = arith.constant 0 : i32
    %c0_i32_0 = arith.constant 0 : i32
    return %arg0, %c0_i32 : i32, i32
  }
}

</mosaic_0001>

<llo_original>
// kernel: tpu_custom_call.1
$region0: #{tpu_custom_call.1}
  #allocation0 [shape = 'u32[]', space=smem, size = 0x4, offset = 0x4, fixed_abs, tag = 'smem constant byte address 0x4 - core index']
  #allocation1 [shape = 'u32[144,128]{1,0:T(1,128)}', space=vmem, size = 0x12000, scoped, tag = 'internal scratch']
  %s0 = inlined_call_operand.hbm [shape: f32[2,256], index: 0, kind: input, shape index: {}]
  %s1 = inlined_call_operand.hbm [shape: f32[2,512], index: 1, kind: output, shape index: {}]
  %s2 = sld [smem:[#allocation0]]
  $region18: #{tpu_custom_call.1} parent=0
    _
  %s4 = ssub.s32 1, %s2
  %s5 = scalar_select 0, %s4, %s2
  $region1: #{tpu_custom_call.1} parent=0
    #allocation2 [shape = 'u8[2048]{0}', space=vmem, size = 0x800, scoped, tag = 'input window, operand 0, single buffered']
    #allocation3 [shape = 's32[1]{0}', space=sflag, size = 0x4, scoped, tag = 'scoped memory for tpu_custom_call.1']
    #allocation4 [shape = 's32[1]{0}', space=sflag, size = 0x4, scoped, tag = 'scoped memory for tpu_custom_call.1']
    #allocation5 [shape = 'u8[4096]{0}', space=vmem, size = 0x1000, scoped, tag = 'output window, operand 0, single buffered']
    %6 = vsyncpa [#allocation3], 0
    %7 = vsyncpa [#allocation4], 0
    // Predicated region
    $region2: #{tpu_custom_call.1} parent=1 // pred_check
      _
    $region3: #{tpu_custom_call.1} parent=1 // pred_check_branch
      %9 = sbr.rel (0) target = $region5
    $region4: #{tpu_custom_call.1} parent=1 // pred_region
      %s11 = ssub.s32 64, 64
      %12 = vsyncadd [#allocation3], %s11
      %s14 = sshll.u32 [#allocation2], 4
      %s15 = int_to_ptr.vmem [resolvable:$true] %s14
      %17 = dma.hbm_to_vmem [thread:$0]  %s0, 64, %s15, [#allocation3]
    $region5: #{tpu_custom_call.1} parent=1 // pred_fallthru
      _
    // Predicated region
    $region6: #{tpu_custom_call.1} parent=1 // pred_check
      _
    $region7: #{tpu_custom_call.1} parent=1 // pred_check_branch
      %19 = sbr.rel (0) target = $region9
    $region8: #{tpu_custom_call.1} parent=1 // pred_region
      %20 = dma.done [#allocation3], 64
    $region9: #{tpu_custom_call.1} parent=1 // pred_fallthru
      _
    %v21 = vld [vmem:[#allocation2] sm:$0xf]
    %v22 = vlaneseq
    %v23 = vand.u32 %v22, 127
    %v24 = vadd.s32 %v23, 128
    %vm25 = vcmp.lt.s32.totalorder %v23, 0
    %v26 = vsub.s32 0, %v23
    %v27 = vsel %vm25, %v26, %v23
    %v28 = vshrl.u32 %v27, 4
    %v29 = vand.u32 %v27, 15
    %v30 = vsub.s32 0, %v29
    %v31 = vsel %vm25, %v30, %v29
    %vm32 = vcmp.lt.s32.totalorder %v24, 0
    %v33 = vsub.s32 0, %v24
    %v34 = vsel %vm32, %v33, %v24
    %v35 = vshrl.u32 %v34, 4
    %v36 = vand.u32 %v34, 15
    %v37 = vsub.s32 0, %v36
    %v38 = vsel %vm32, %v37, %v36
    %vm39 = vcmp.ne.s32.totalorder %v31, 0
    %vm40 = vcmp.ne.s32.totalorder %v38, 0
    %vm41 = vcmp.lt.s32.totalorder %v31, 0
    %vm42 = vcmp.lt.s32.totalorder %v38, 0
    %vm43 = vmand %vm41, %vm39
    %vm44 = vmand %vm42, %vm40
    %v45 = vadd.s32 %v31, 16
    %v46 = vadd.s32 %v38, 16
    %v47 = vsel %vm43, %v45, %v31
    %v48 = vsel %vm44, %v46, %v38
    %vm49 = vcmp.ne.s32.totalorder %v47, 0
    %vm50 = vcmp.ne.s32.totalorder %v48, 0
    %vm51 = vcmp.ne.s32.totalorder %v47, 15
    %vm52 = vcmp.ne.s32.totalorder %v48, 15
    %vm53 = vcmp.ge.s32.totalorder %v23, 16
    %vm54 = vcmp.ge.s32.totalorder %v24, 16
    %vm55 = vcmp.lt.s32.totalorder %v23, 240
    %vm56 = vcmp.lt.s32.totalorder %v24, 240
    %v59 = vunpack.c.l.s4 1983009808
    %v60 = vunpack.c.0.s8 %v59
    %v61 = vlaneseq
    %v62 = vshrl.u32 %v61, 7
    %v63 = vsub.s32 %v60, %v62
    %v64 = vrot.slane %v21, %v63
    %v65 = vcombine.high %v64, %v64
    %68 = vrot.lane.b32.xlu0 %v64, 1
    %v69 = vpop.permute.xlu0 %68
    %70 = vrot.lane.b32.xlu0 %v65, 1
    %v71 = vpop.permute.xlu0 %70
    %vm72 = vcmp.lt.s32.totalorder %v23, 1
    %v73 = vsel %vm72, %v69, %v71
    %v74 = vsel %vm72, %v71, %v69
    %v75 = vsel %vm49, 1, 0
    %v76 = vsel %vm50, 1, 0
    %vm77 = vcmp.eq.s32.totalorder %v75, 1
    %vm78 = vcmp.eq.s32.totalorder %v76, 1
    %v79 = vsel %vm77, %v74, 0.0
    %v80 = vsel %vm78, %v73, 0.0
    %81 = vrot.lane.b32.xlu0 %v64, 127
    %v82 = vpop.permute.xlu0 %81
    %83 = vrot.lane.b32.xlu0 %v65, 127
    %v84 = vpop.permute.xlu0 %83
    %vm85 = vcmp.lt.s32.totalorder %v23, 127
    %v86 = vsel %vm85, %v82, %v84
    %v87 = vsel %vm85, %v84, %v82
    %v88 = vsel %vm51, 1, 0
    %v89 = vsel %vm52, 1, 0
    %vm90 = vcmp.eq.s32.totalorder %v88, 1
    %vm91 = vcmp.eq.s32.totalorder %v89, 1
    %v92 = vsel %vm90, %v86, 0.0
    %v93 = vsel %vm91, %v87, 0.0
    %v94 = vsub.f32 %v79, %v92
    %v95 = vsub.f32 %v80, %v93
    %v96 = vadd.f32 %v79, %v64
    %v97 = vadd.f32 %v80, %v65
    %v98 = vadd.f32 %v96, %v64
    %v99 = vadd.f32 %v97, %v65
    %v100 = vadd.f32 %v98, %v92
    %v101 = vadd.f32 %v99, %v93
    %102 = vrot.lane.b32.xlu0 %v94, 16
    %v103 = vpop.permute.xlu0 %102
    %104 = vrot.lane.b32.xlu0 %v95, 16
    %v105 = vpop.permute.xlu0 %104
    %vm106 = vcmp.lt.s32.totalorder %v23, 16
    %v107 = vsel %vm106, %v103, %v105
    %v108 = vsel %vm106, %v105, %v103
    %v109 = vsel %vm53, 1, 0
    %v110 = vsel %vm54, 1, 0
    %vm111 = vcmp.eq.s32.totalorder %v109, 1
    %vm112 = vcmp.eq.s32.totalorder %v110, 1
    %v113 = vsel %vm111, %v108, 0.0
    %v114 = vsel %vm112, %v107, 0.0
    %115 = vrot.lane.b32.xlu0 %v94, 112
    %v116 = vpop.permute.xlu0 %115
    %117 = vrot.lane.b32.xlu0 %v95, 112
    %v118 = vpop.permute.xlu0 %117
    %vm119 = vcmp.lt.s32.totalorder %v23, 112
    %v120 = vsel %vm119, %v116, %v118
    %v121 = vsel %vm119, %v118, %v116
    %v122 = vsel %vm55, 1, 0
    %v123 = vsel %vm56, 1, 0
    %vm124 = vcmp.eq.s32.totalorder %v122, 1
    %vm125 = vcmp.eq.s32.totalorder %v123, 1
    %v126 = vsel %vm124, %v120, 0.0
    %v127 = vsel %vm125, %v121, 0.0
    %128 = vrot.lane.b32.xlu0 %v100, 16
    %v129 = vpop.permute.xlu0 %128
    %130 = vrot.lane.b32.xlu0 %v101, 16
    %v131 = vpop.permute.xlu0 %130
    %v132 = vsel %vm106, %v129, %v131
    %v133 = vsel %vm106, %v131, %v129
    %v134 = vsel %vm111, %v133, 0.0
    %v135 = vsel %vm112, %v132, 0.0
    %136 = vrot.lane.b32.xlu0 %v100, 112
    %v137 = vpop.permute.xlu0 %136
    %138 = vrot.lane.b32.xlu0 %v101, 112
    %v139 = vpop.permute.xlu0 %138
    %v140 = vsel %vm119, %v137, %v139
    %v141 = vsel %vm119, %v139, %v137
    %v142 = vsel %vm124, %v140, 0.0
    %v143 = vsel %vm125, %v141, 0.0
    %v144 = vadd.f32 %v113, %v94
    %v145 = vadd.f32 %v114, %v95
    %v146 = vadd.f32 %v144, %v94
    %v147 = vadd.f32 %v145, %v95
    %v148 = vadd.f32 %v146, %v126
    %v149 = vadd.f32 %v147, %v127
    %v150 = vsub.f32 %v134, %v142
    %v151 = vsub.f32 %v135, %v143
    %v154 = vcombine.low %v148, %v149
    %v156 = vunpack.c.l.s4 1983009808
    %v157 = vunpack.c.0.s8 %v156
    %v158 = vlaneseq
    %v159 = vshrl.u32 %v158, 7
    %v160 = vsub.s32 %v157, %v159
    %v161 = vrot.slane %v154, %v160
    %163 = vst [vmem:[#allocation5] sm:$0xf] %v161
    %v166 = vcombine.low %v150, %v151
    %v168 = vunpack.c.l.s4 1983009808
    %v169 = vunpack.c.0.s8 %v168
    %v170 = vlaneseq
    %v171 = vshrl.u32 %v170, 7
    %v172 = vsub.s32 %v169, %v171
    %v173 = vrot.slane %v166, %v172
    %175 = vst [vmem:[#allocation5 + $0x4] sm:$0xf] %v173
    // Predicated region
    $region10: #{tpu_custom_call.1} parent=1 // pred_check
      _
    $region11: #{tpu_custom_call.1} parent=1 // pred_check_branch
      %177 = sbr.rel (0) target = $region13
    $region12: #{tpu_custom_call.1} parent=1 // pred_region
      %s179 = ssub.s32 128, 128
      %180 = vsyncadd [#allocation4], %s179
      %s182 = sshll.u32 [#allocation5], 4
      %s183 = int_to_ptr.vmem [resolvable:$true] %s182
      %185 = dma.vmem_to_hbm [thread:$0]  %s183, 128, %s1, [#allocation4]
    $region13: #{tpu_custom_call.1} parent=1 // pred_fallthru
      _
    // Predicated region
    $region14: #{tpu_custom_call.1} parent=1 // pred_check
      _
    $region15: #{tpu_custom_call.1} parent=1 // pred_check_branch
      %187 = sbr.rel (0) target = $region17
    $region16: #{tpu_custom_call.1} parent=1 // pred_region
      %188 = dma.done [#allocation4], 128
    $region17: #{tpu_custom_call.1} parent=1 // pred_fallthru
      _
    %189 = vsyncpa [#allocation3], 1
    %190 = vsyncpa [#allocation4], 1

</llo_original>
